<compile_context>
chip_gen: v7x
topology: tpu7x:2x2x1
jax: 0.10.0
libtpu: 0.0.40
codegen_flags: <defaults>
</compile_context>

<pallas_src>
from functools import partial

import jax
import jax.numpy as jnp
from jax.experimental import pallas as pl
from jax.experimental.pallas import tpu as pltpu

RECON_COEFF = 8.0   # self.reconstruction_coefficient
KLD_CLIP = 3.0      # kld_loss clip_value (a floor; matches the torch masking)
NUM_CORES = 2       # leading 'parallel' grid axis; sharded across TCs on v7x


# --------------------------------------------------------------------------
# Kernel 1: streaming cross-entropy partial sums
# --------------------------------------------------------------------------
def _ce_partial_kernel(n_rows, tile_rows, tiles_per_core, needs_mask,
                       logits_ref, targets_ref, acc_ref, cols_ref):
    c = pl.program_id(0)          # core slab
    t = pl.program_id(1)          # tile within the slab (reduction axis)

    @pl.when(t == 0)
    def _init():
        acc_ref[...] = jnp.zeros_like(acc_ref)
        # Class-index iota, generated once per core (hoisted out of the loop).
        cols_ref[...] = jax.lax.broadcasted_iota(jnp.int32, cols_ref.shape, 1)

    x = logits_ref[...]                       # (TN, C), producer dtype
    tgt = targets_ref[...]                    # (TN, 1) int32
    match = cols_ref[...] == tgt              # (1,C) vs (TN,1) -> (TN,C) bool

    if x.dtype == jnp.bfloat16:
        # Packed bf16 VALU/EUP path (v6e/v7x); f32 only for the accumulations.
        # (On v5e Mosaic falls back to f32 internally - correct, just no win.)
        row_max = jnp.max(x, axis=-1, keepdims=True)
        shifted = x - row_max                                       # bf16
        sum_exp = jnp.sum(jnp.exp(shifted).astype(jnp.float32),
                          axis=-1, keepdims=True)                   # (TN,1) f32
        # exactly one non-zero per row -> bf16 sum is exact
        tgt_shifted = jnp.sum(jnp.where(match, shifted, jnp.zeros((), x.dtype)),
                              axis=-1, keepdims=True).astype(jnp.float32)
    else:
        xf = x.astype(jnp.float32)
        row_max = jnp.max(xf, axis=-1, keepdims=True)
        shifted = xf - row_max
        sum_exp = jnp.sum(jnp.exp(shifted), axis=-1, keepdims=True)
        tgt_shifted = jnp.sum(jnp.where(match, shifted, 0.0),
                              axis=-1, keepdims=True)

    nll = jnp.log(sum_exp) - tgt_shifted                            # (TN,1) f32

    if needs_mask:  # static: grid covers more rows than n_rows
        logical_tile = c * tiles_per_core + t
        num_full_tiles = n_rows // tile_rows     # tiles guaranteed fully valid

        @pl.when(logical_tile < num_full_tiles)          # interior: no mask
        def _full():
            acc_ref[...] += nll

        @pl.when(logical_tile >= num_full_tiles)         # partial / padding
        def _partial():
            rows = (logical_tile * tile_rows
                    + jax.lax.broadcasted_iota(jnp.int32, nll.shape, 0))
            acc_ref[...] += jnp.where(rows < n_rows, nll, 0.0)
    else:
        acc_ref[...] += nll


# --------------------------------------------------------------------------
# Kernel 2: finalize (partial-sum reduce + KLD + clip + combine)
# --------------------------------------------------------------------------
def _finalize_kernel(n_rows, coeff_ref, partial_ref, mu_ref, logvar_ref,
                     loss_ref, rec_ref, kld_ref):
    rec = jnp.sum(partial_ref[...]) / jnp.float32(n_rows)

    mu = mu_ref[...].astype(jnp.float32)
    lv = logvar_ref[...].astype(jnp.float32)
    kld_rows = -0.5 * jnp.sum(1.0 + lv - mu * mu - jnp.exp(lv),
                              axis=1, keepdims=True)                # (B, 1)
    kld = jnp.sum(kld_rows) / jnp.float32(mu.shape[0])
    # keep_mask*loss + clip_mask*clip  ==  max(loss, clip)
    kld = jnp.maximum(kld, jnp.float32(KLD_CLIP))

    coeff = coeff_ref[0]
    loss_ref[0] = jnp.float32(RECON_COEFF) * rec + coeff * kld
    rec_ref[0] = rec
    kld_ref[0] = kld


# --------------------------------------------------------------------------
# Tiling / VMEM heuristics (per generation)
# --------------------------------------------------------------------------
def _vmem_limit_and_tile_budget():
    """(vmem_limit_bytes, per-tile f32-equivalent budget).  v7x has only
    64 MiB VMEM per TensorCore; v5e/v6e have 128 MiB."""
    try:
        cap = int(pltpu.get_tpu_info().vmem_capacity_bytes)
    except Exception:
        cap = 64 * 1024 * 1024                   # conservative (v7x) fallback
    vmem_limit = min(96 * 1024 * 1024, (cap * 3) // 4)
    tile_budget = min(16 * 1024 * 1024,
                      max(2 * 1024 * 1024, vmem_limit // 8))
    return vmem_limit, tile_budget


def _choose_tile_rows(n_rows, n_classes, tile_budget_bytes):
    """Biggest sublane-aligned row tile whose lane-padded f32 footprint fits
    the per-tile budget (amortizes the ~0.35us per-grid-step overhead)."""
    lane_c = ((n_classes + 127) // 128) * 128    # lanes pad to 128 in VMEM
    row_bytes = lane_c * 4                       # f32 working layout
    tile = max(8, (tile_budget_bytes // row_bytes) // 8 * 8)
    rows_pad8 = max(8, ((n_rows + 7) // 8) * 8)
    return min(tile, rows_pad8)


# --------------------------------------------------------------------------
# Public wrapper
# --------------------------------------------------------------------------
def sequence_variational_loss(sequence_of_logits, sequence_of_targets,
                              mu, logvar, iteration):
    """Returns (loss, reconstruction_loss, kld_loss) as float32 scalars."""
    T, B, C = sequence_of_logits.shape
    n_rows = T * B

    # Keep the producer dtype (bf16 stays bf16 in HBM); no jnp.pad.
    logits2d = sequence_of_logits.reshape(n_rows, C)
    targets2d = sequence_of_targets.reshape(n_rows, 1).astype(jnp.int32)

    vmem_limit, tile_budget = _vmem_limit_and_tile_budget()
    tile_rows = _choose_tile_rows(n_rows, C, tile_budget)
    num_tiles = (n_rows + tile_rows - 1) // tile_rows
    tiles_per_core = (num_tiles + NUM_CORES - 1) // NUM_CORES
    needs_mask = (n_rows % tile_rows != 0) or (num_tiles % NUM_CORES != 0)

    # KLD schedule: one scalar tanh, hoisted out of the hot kernel.
    it = jnp.asarray(iteration, dtype=jnp.float32)
    kld_coeff = ((jnp.tanh((it - 166250.0) / 40000.0) + 1.0) * 0.5).reshape(1)

    def _tile_idx(c, t):
        # Clamp: padding tiles (only on the last core) alias the last real
        # block and are fully masked out inside the kernel.
        return (jnp.minimum(c * tiles_per_core + t, num_tiles - 1), 0)

    grid_spec = pltpu.PrefetchScalarGridSpec(
        num_scalar_prefetch=0,
        grid=(NUM_CORES, tiles_per_core),
        in_specs=[
            pl.BlockSpec((tile_rows, C), _tile_idx),      # logits tile
            pl.BlockSpec((tile_rows, 1), _tile_idx),      # targets tile
        ],
        out_specs=pl.BlockSpec((tile_rows, 1), lambda c, t: (c, 0)),
        scratch_shapes=[pltpu.VMEM((1, C), jnp.int32)],   # hoisted class iota
    )

    partials = pl.pallas_call(
        partial(_ce_partial_kernel, n_rows, tile_rows, tiles_per_core,
                needs_mask),
        out_shape=jax.ShapeDtypeStruct((NUM_CORES * tile_rows, 1), jnp.float32),
        grid_spec=grid_spec,
        compiler_params=pltpu.CompilerParams(
            dimension_semantics=("parallel", "arbitrary"),
            vmem_limit_bytes=vmem_limit),
    )(logits2d, targets2d)

    smem = pl.BlockSpec(memory_space=pltpu.MemorySpace.SMEM)
    vmem = pl.BlockSpec(memory_space=pltpu.MemorySpace.VMEM)
    loss, rec, kld = pl.pallas_call(
        partial(_finalize_kernel, n_rows),
        out_shape=(jax.ShapeDtypeStruct((1,), jnp.float32),
                   jax.ShapeDtypeStruct((1,), jnp.float32),
                   jax.ShapeDtypeStruct((1,), jnp.float32)),
        in_specs=[smem, vmem, vmem, vmem],
        out_specs=(smem, smem, smem),
    )(kld_coeff, partials, mu, logvar)
    return loss[0], rec[0], kld[0]


# --------------------------------------------------------------------------
# Plain-JAX reference mirroring the PyTorch module
# --------------------------------------------------------------------------
def _reference(sequence_of_logits, sequence_of_targets, mu, logvar, iteration):
    logp = jax.nn.log_softmax(sequence_of_logits.astype(jnp.float32), axis=-1)
    nll = -jnp.take_along_axis(logp, sequence_of_targets[..., None], axis=-1)[..., 0]
    rec = jnp.mean(jnp.mean(nll, axis=1))       # per-step batch mean, then mean over T
    kld = jnp.mean(-0.5 * jnp.sum(1 + logvar - mu ** 2 - jnp.exp(logvar), axis=1))
    kld = jnp.maximum(kld, KLD_CLIP)
    coeff = (jnp.tanh((iteration - 166250.0) / 40000.0) + 1.0) / 2.0
    loss = RECON_COEFF * rec + coeff * kld
    return loss, rec, kld


if __name__ == "__main__":
    key = jax.random.PRNGKey(0)
    k1, k2, k3, k4 = jax.random.split(key, 4)

    T, B, C, D = 8, 2, 16, 32          # seq len, batch, classes, latent dim
    iteration = 100000.0

    seq_logits = jax.random.normal(k1, (T, B, C), dtype=jnp.float32)
    seq_targets = jax.random.randint(k2, (T, B), 0, C, dtype=jnp.int32)
    mu = jax.random.normal(k3, (B, D), dtype=jnp.float32)
    logvar = 0.1 * jax.random.normal(k4, (B, D), dtype=jnp.float32)

    # f32 producers: exact path
    loss, rec, kld = sequence_variational_loss(seq_logits, seq_targets,
                                               mu, logvar, iteration)
    jax.block_until_ready((loss, rec, kld))

    ref_loss, ref_rec, ref_kld = _reference(seq_logits, seq_targets,
                                            mu, logvar, iteration)
    assert jnp.allclose(loss, ref_loss, rtol=1e-5, atol=1e-5)
    assert jnp.allclose(rec, ref_rec, rtol=1e-5, atol=1e-5)
    assert jnp.allclose(kld, ref_kld, rtol=1e-5, atol=1e-5)

    # bf16 producers exercise the packed bf16 VALU/EUP path (looser tolerance)
    bf_logits = seq_logits.astype(jnp.bfloat16)
    bloss, brec, bkld = sequence_variational_loss(bf_logits, seq_targets,
                                                  mu, logvar, iteration)
    jax.block_until_ready((bloss, brec, bkld))
    rl2, rr2, rk2 = _reference(bf_logits.astype(jnp.float32), seq_targets,
                               mu, logvar, iteration)
    assert jnp.allclose(brec, rr2, rtol=3e-2, atol=3e-2)
    assert jnp.allclose(bkld, rk2, rtol=1e-5, atol=1e-5)
    assert jnp.allclose(bloss, rl2, rtol=3e-2, atol=3e-2)

    print("KERNEL_OK")
</pallas_src>

<mosaic_0001>
module attributes {stable_mosaic.version = 11 : i64} {
  func.func @_ce_partial_kernel(%arg0: i32, %arg1: i32, %arg2: memref<16x16xf32, #tpu.memory_space<vmem>>, %arg3: memref<16x1xi32, #tpu.memory_space<vmem>>, %arg4: memref<16x1xf32, #tpu.memory_space<vmem>>, %arg5: memref<1x16xi32, #tpu.memory_space<vmem>>) attributes {dimension_semantics = [#tpu.dimension_semantics<parallel>, #tpu.dimension_semantics<arbitrary>], iteration_bounds = array<i64: 2, 1>, scalar_prefetch = 0 : i64, scratch_operands = 1 : i64, tpu.core_type = #tpu.core_type<tc>, window_params = [{transform_indices = @transform_0, window_bounds = array<i64: 16, 16>}, {transform_indices = @transform_1, window_bounds = array<i64: 16, 1>}, {transform_indices = @transform_2, window_bounds = array<i64: 16, 1>}]} {
    %c0_i32 = arith.constant 0 : i32
    %0 = arith.cmpi eq, %arg1, %c0_i32 : i32
    %1 = arith.extui %0 : i1 to i32
    %c0_i32_0 = arith.constant 0 : i32
    %2 = arith.cmpi ne, %1, %c0_i32_0 : i32
    scf.if %2 {
      %cst_13 = arith.constant 0.000000e+00 : f32
      %30 = vector.broadcast %cst_13 : f32 to vector<16x1xf32>
      %c0_14 = arith.constant 0 : index
      %c0_15 = arith.constant 0 : index
      %31 = vector.load %arg4[%c0_14, %c0_15] : memref<16x1xf32, #tpu.memory_space<vmem>>, vector<16x1xf32>
      tpu.vector_store %arg4[%c0_14, %c0_15], %30 {strides = array<i32>} : memref<16x1xf32, #tpu.memory_space<vmem>>, vector<16x1xf32>,
      %32 = tpu.iota {dimensions = array<i32: 1>} : vector<1x16xi32>
      %c0_16 = arith.constant 0 : index
      %c0_17 = arith.constant 0 : index
      %33 = vector.load %arg5[%c0_16, %c0_17] : memref<1x16xi32, #tpu.memory_space<vmem>>, vector<1x16xi32>
      tpu.vector_store %arg5[%c0_16, %c0_17], %32 {strides = array<i32>} : memref<1x16xi32, #tpu.memory_space<vmem>>, vector<1x16xi32>,
    } else {
    }
    %c0 = arith.constant 0 : index
    %c0_1 = arith.constant 0 : index
    %3 = vector.load %arg2[%c0, %c0_1] : memref<16x16xf32, #tpu.memory_space<vmem>>, vector<16x16xf32>
    %c0_2 = arith.constant 0 : index
    %c0_3 = arith.constant 0 : index
    %4 = vector.load %arg3[%c0_2, %c0_3] : memref<16x1xi32, #tpu.memory_space<vmem>>, vector<16x1xi32>
    %c0_4 = arith.constant 0 : index
    %c0_5 = arith.constant 0 : index
    %5 = vector.load %arg5[%c0_4, %c0_5] : memref<1x16xi32, #tpu.memory_space<vmem>>, vector<1x16xi32>
    %6 = vector.broadcast %5 : vector<1x16xi32> to vector<16x16xi32>
    %7 = vector.broadcast %4 : vector<16x1xi32> to vector<16x16xi32>
    %8 = arith.cmpi eq, %6, %7 : vector<16x16xi32>
    %cst = arith.constant dense<0xFF800000> : vector<16xf32>
    %9 = vector.multi_reduction <maximumf>, %3, %cst [1] : vector<16x16xf32> to vector<16xf32>
    %10 = vector.shape_cast %9 : vector<16xf32> to vector<16x1xf32>
    %11 = vector.broadcast %10 : vector<16x1xf32> to vector<16x16xf32>
    %12 = arith.subf %3, %11 : vector<16x16xf32>
    %13 = math.exp %12 : vector<16x16xf32>
    %cst_6 = arith.constant dense<0.000000e+00> : vector<16xf32>
    %14 = vector.multi_reduction <add>, %13, %cst_6 [1] : vector<16x16xf32> to vector<16xf32>
    %15 = vector.shape_cast %14 : vector<16xf32> to vector<16x1xf32>
    %cst_7 = arith.constant 0.000000e+00 : f32
    %16 = vector.broadcast %cst_7 : f32 to vector<16x16xf32>
    %17 = arith.select %8, %12, %16 : vector<16x16xi1>, vector<16x16xf32>
    %cst_8 = arith.constant dense<0.000000e+00> : vector<16xf32>
    %18 = vector.multi_reduction <add>, %17, %cst_8 [1] : vector<16x16xf32> to vector<16xf32>
    %19 = vector.shape_cast %18 : vector<16xf32> to vector<16x1xf32>
    %20 = math.log %15 : vector<16x1xf32>
    %21 = arith.subf %20, %19 : vector<16x1xf32>
    %c1_i32 = arith.constant 1 : i32
    %22 = arith.muli %arg0, %c1_i32 : i32
    %23 = arith.addi %22, %arg1 : i32
    %c1_i32_9 = arith.constant 1 : i32
    %24 = arith.cmpi slt, %23, %c1_i32_9 : i32
    %25 = arith.extui %24 : i1 to i32
    %c0_i32_10 = arith.constant 0 : i32
    %26 = arith.cmpi ne, %25, %c0_i32_10 : i32
    scf.if %26 {
      %c0_13 = arith.constant 0 : index
      %c0_14 = arith.constant 0 : index
      %30 = vector.load %arg4[%c0_13, %c0_14] : memref<16x1xf32, #tpu.memory_space<vmem>>, vector<16x1xf32>
      %31 = arith.addf %30, %21 : vector<16x1xf32>
      %c0_15 = arith.constant 0 : index
      %c0_16 = arith.constant 0 : index
      %32 = vector.load %arg4[%c0_15, %c0_16] : memref<16x1xf32, #tpu.memory_space<vmem>>, vector<16x1xf32>
      tpu.vector_store %arg4[%c0_15, %c0_16], %31 {strides = array<i32>} : memref<16x1xf32, #tpu.memory_space<vmem>>, vector<16x1xf32>,
    } else {
    }
    %c1_i32_11 = arith.constant 1 : i32
    %27 = arith.cmpi sge, %23, %c1_i32_11 : i32
    %28 = arith.extui %27 : i1 to i32
    %c0_i32_12 = arith.constant 0 : i32
    %29 = arith.cmpi ne, %28, %c0_i32_12 : i32
    scf.if %29 {
      %c16_i32 = arith.constant 16 : i32
      %30 = arith.muli %23, %c16_i32 : i32
      %31 = tpu.iota {dimensions = array<i32: 0>} : vector<16x1xi32>
      %32 = vector.broadcast %30 : i32 to vector<16x1xi32>
      %33 = arith.addi %32, %31 : vector<16x1xi32>
      %c0_13 = arith.constant 0 : index
      %c0_14 = arith.constant 0 : index
      %34 = vector.load %arg4[%c0_13, %c0_14] : memref<16x1xf32, #tpu.memory_space<vmem>>, vector<16x1xf32>
      %c16_i32_15 = arith.constant 16 : i32
      %35 = vector.broadcast %c16_i32_15 : i32 to vector<16x1xi32>
      %36 = arith.cmpi slt, %33, %35 : vector<16x1xi32>
      %cst_16 = arith.constant 0.000000e+00 : f32
      %37 = vector.broadcast %cst_16 : f32 to vector<16x1xf32>
      %38 = arith.select %36, %21, %37 : vector<16x1xi1>, vector<16x1xf32>
      %39 = arith.addf %34, %38 : vector<16x1xf32>
      %c0_17 = arith.constant 0 : index
      %c0_18 = arith.constant 0 : index
      %40 = vector.load %arg4[%c0_17, %c0_18] : memref<16x1xf32, #tpu.memory_space<vmem>>, vector<16x1xf32>
      tpu.vector_store %arg4[%c0_17, %c0_18], %39 {strides = array<i32>} : memref<16x1xf32, #tpu.memory_space<vmem>>, vector<16x1xf32>,
    } else {
    }
    return
  }
  func.func @transform_0(%arg0: i32, %arg1: i32) -> (i32, i32) {
    %c1_i32 = arith.constant 1 : i32
    %0 = arith.muli %arg0, %c1_i32 : i32
    %1 = arith.addi %0, %arg1 : i32
    %c0_i32 = arith.constant 0 : i32
    %2 = arith.minsi %1, %c0_i32 : i32
    %c0_i32_0 = arith.constant 0 : i32
    %c0_i32_1 = arith.constant 0 : i32
    return %2, %c0_i32_0 : i32, i32
  }
  func.func @transform_1(%arg0: i32, %arg1: i32) -> (i32, i32) {
    %c1_i32 = arith.constant 1 : i32
    %0 = arith.muli %arg0, %c1_i32 : i32
    %1 = arith.addi %0, %arg1 : i32
    %c0_i32 = arith.constant 0 : i32
    %2 = arith.minsi %1, %c0_i32 : i32
    %c0_i32_0 = arith.constant 0 : i32
    %c0_i32_1 = arith.constant 0 : i32
    return %2, %c0_i32_0 : i32, i32
  }
  func.func @transform_2(%arg0: i32, %arg1: i32) -> (i32, i32) {
    %c0_i32 = arith.constant 0 : i32
    %c0_i32_0 = arith.constant 0 : i32
    return %arg0, %c0_i32 : i32, i32
  }
}

</mosaic_0001>

<llo_original>
// kernel: tpu_custom_call.1
$region0: #{tpu_custom_call.1}
  #allocation0 [shape = 'u32[]', space=smem, size = 0x4, offset = 0x4, fixed_abs, tag = 'smem constant byte address 0x4 - core index']
  #allocation1 [shape = 'u32[144,128]{1,0:T(1,128)}', space=vmem, size = 0x12000, scoped, tag = 'internal scratch']
  #allocation2 [shape = 's32[1,16]{1,0:T(1,128)}', space=vmem, size = 0x200, scoped, tag = 'scratch operand']
  %s0 = inlined_call_operand.vmem [shape: f32[16,16], index: 0, kind: input, shape index: {}]
  %s1 = inlined_call_operand.vmem [shape: s32[16,1], index: 1, kind: input, shape index: {}]
  %s2 = inlined_call_operand.vmem [shape: f32[32,1], index: 2, kind: output, shape index: {}]
  %s3 = sld [smem:[#allocation0]]
  $region53: #{tpu_custom_call.1} parent=0
    _
  %s5 = ssub.s32 1, %s3
  %s6 = scalar_select 0, %s5, %s3
  loop: start=0, step=1, limit=4
  $region2: #{tpu_custom_call.1} parent=0 // loop_pre_header
    _
  $region3: #{tpu_custom_call.1} parent=0 // loop_header
    %s8 = sphi 0, %s12
    %p9 = scmp.ge.s32.totalorder %s8, 4
    %s15 = sphi 0, %s27
    %s16 = sphi 0, %s23
    %s17 = sphi 0, %s15
    %s18 = sphi 0, %s16
    %s19 = sphi 0, %s17
    %s20 = sphi 0, %s18
    %s36 = sphi 0, %s38
    %s39 = sphi 0, %s36
    %s40 = sphi 0, %s39
    %s56 = sphi 0, %s40
    %s68 = sphi 0, %s70
    %s71 = sphi 0, %s68
    %s72 = sphi 0, %s71
    %s88 = sphi 0, %s72
    %s94 = sphi 0, %s96
    %s97 = sphi 0, %s94
    %s98 = sphi 0, %s97
    %s114 = sphi 0, %s98
  $region4: #{tpu_custom_call.1} parent=0 // loop_header_branch
    %11 = sbr.rel (%p9) target = $region8
  $region5: #{tpu_custom_call.1} parent=0 // loop_body
    %s13 = ssub.s32 %s8, 1
    %s14 = ssub.s32 %s8, 2
    %s21 = sadd.s32 1, %s16
    %p22 = scmp.ge.s32.totalorder %s21, 1
    %s23 = scalar_select %p22, 0, %s21
    %s24 = sadd.s32 1, %s15
    %s25 = scalar_select %p22, %s24, %s15
    %p26 = scmp.ge.s32.totalorder %s25, 2
    %s27 = scalar_select %p26, 0, %s25
    %s28 = sadd.s32 %s15, %s16
    %p29 = scmp.lt.s32.totalorder %s28, 0
    %s30 = scalar_select %p29, %s28, 0
    %s31 = sadd.s32 %s27, %s23
    %p32 = scmp.lt.s32.totalorder %s31, 0
    %s33 = scalar_select %p32, %s31, 0
    %s34 = ssub.s32 %s30, %s33
    %p35 = scmp.eq.s32.totalorder %s34, 0
    %s37 = sadd.s32 %s36, 1
    %s38 = scalar_select %p35, %s36, %s37
    %p41 = pneg %p35
    %p42 = scmp.eq.s32.totalorder %s8, 1
    %p43 = por %p41, %p42
    %p44 = scmp.ne.s32.totalorder %s36, %s39
    %p45 = scmp.eq.s32.totalorder %s8, 0
    %p46 = por %p44, %p45
    %p47 = scmp.ne.s32.totalorder %s36, %s39
    %p48 = scmp.eq.s32.totalorder %s13, 1
    %p49 = por %p47, %p48
    %p50 = scmp.ne.s32.totalorder %s39, %s40
    %p51 = scmp.eq.s32.totalorder %s13, 0
    %p52 = por %p50, %p51
    %p53 = scmp.ne.s32.totalorder %s39, %s40
    %p54 = scmp.eq.s32.totalorder %s14, 1
    %p55 = por %p53, %p54
    %p57 = scmp.ne.s32.totalorder %s40, %s56
    %p58 = scmp.eq.s32.totalorder %s14, 0
    %p59 = por %p57, %p58
    %s60 = sadd.s32 %s15, %s16
    %p61 = scmp.lt.s32.totalorder %s60, 0
    %s62 = scalar_select %p61, %s60, 0
    %s63 = sadd.s32 %s27, %s23
    %p64 = scmp.lt.s32.totalorder %s63, 0
    %s65 = scalar_select %p64, %s63, 0
    %s66 = ssub.s32 %s62, %s65
    %p67 = scmp.eq.s32.totalorder %s66, 0
    %s69 = sadd.s32 %s68, 1
    %s70 = scalar_select %p67, %s68, %s69
    %p73 = pneg %p67
    %p74 = scmp.eq.s32.totalorder %s8, 1
    %p75 = por %p73, %p74
    %p76 = scmp.ne.s32.totalorder %s68, %s71
    %p77 = scmp.eq.s32.totalorder %s8, 0
    %p78 = por %p76, %p77
    %p79 = scmp.ne.s32.totalorder %s68, %s71
    %p80 = scmp.eq.s32.totalorder %s13, 1
    %p81 = por %p79, %p80
    %p82 = scmp.ne.s32.totalorder %s71, %s72
    %p83 = scmp.eq.s32.totalorder %s13, 0
    %p84 = por %p82, %p83
    %p85 = scmp.ne.s32.totalorder %s71, %s72
    %p86 = scmp.eq.s32.totalorder %s14, 1
    %p87 = por %p85, %p86
    %p89 = scmp.ne.s32.totalorder %s72, %s88
    %p90 = scmp.eq.s32.totalorder %s14, 0
    %p91 = por %p89, %p90
    %s92 = ssub.s32 %s15, %s27
    %p93 = scmp.eq.s32.totalorder %s92, 0
    %s95 = sadd.s32 %s94, 1
    %s96 = scalar_select %p93, %s94, %s95
    %p99 = pneg %p93
    %p100 = scmp.eq.s32.totalorder %s8, 1
    %p101 = por %p99, %p100
    %p102 = scmp.ne.s32.totalorder %s94, %s97
    %p103 = scmp.eq.s32.totalorder %s8, 0
    %p104 = por %p102, %p103
    %p105 = scmp.ne.s32.totalorder %s94, %s97
    %p106 = scmp.eq.s32.totalorder %s13, 1
    %p107 = por %p105, %p106
    %p108 = scmp.ne.s32.totalorder %s97, %s98
    %p109 = scmp.eq.s32.totalorder %s13, 0
    %p110 = por %p108, %p109
    %p111 = scmp.ne.s32.totalorder %s97, %s98
    %p112 = scmp.eq.s32.totalorder %s14, 1
    %p113 = por %p111, %p112
    %p115 = scmp.ne.s32.totalorder %s98, %s114
    %p116 = scmp.eq.s32.totalorder %s14, 0
    %p117 = por %p115, %p116
    %p118 = scmp.le.s32.totalorder 1, %s8
    %p119 = scmp.lt.s32.totalorder %s8, 3
    %p120 = pnand %p118, %p119
    %p121 = pneg %p120
    // Predicated region
    $region9: #{tpu_custom_call.1} parent=5 // pred_check
      _
    $region10: #{tpu_custom_call.1} parent=5 // pred_check_branch
      %123 = sbr.rel (%p120) target = $region12
    $region11: #{tpu_custom_call.1} parent=5 // pred_region
      %s124 = ssub.s32 %s8, 1
    $region12: #{tpu_custom_call.1} parent=5 // pred_fallthru
      _
    %p125 = scmp.lt.s32.totalorder %s8, 2
    // Predicated region
    $region13: #{tpu_custom_call.1} parent=5 // pred_check
      %p126 = pneg %p125
    $region14: #{tpu_custom_call.1} parent=5 // pred_check_branch
      %128 = sbr.rel (%p126) target = $region16
    $region15: #{tpu_custom_call.1} parent=5 // pred_region
      // Predicated region
      $region17: #{tpu_custom_call.1} parent=15 // pred_check
        %p129 = pneg %p46
      $region18: #{tpu_custom_call.1} parent=15 // pred_check_branch
        %131 = sbr.rel (%p129) target = $region20
      $region19: #{tpu_custom_call.1} parent=15 // pred_region
        %s132 = sadd.s32 %s15, %s16
        %p133 = scmp.lt.s32.totalorder %s132, 0
        %s134 = scalar_select %p133, %s132, 0
        %s135 = smul.u32 2, %s134
        %p136 = scmp.lt.s32.totalorder %s135, 1
        %s137 = scalar_select %p136, %s135, 1
        %s138 = smul.addr %s137, 8
        %s139 = scalar_lea.vmem %s0, %s138
        %s140 = sadd.s32 %s15, %s16
        %p141 = scmp.lt.s32.totalorder %s140, 0
        %s142 = scalar_select %p141, %s140, 0
        %s143 = smul.u32 2, %s142
      $region20: #{tpu_custom_call.1} parent=15 // pred_fallthru
        _
      // Predicated region
      $region21: #{tpu_custom_call.1} parent=15 // pred_check
        %p144 = pneg %p78
      $region22: #{tpu_custom_call.1} parent=15 // pred_check_branch
        %146 = sbr.rel (%p144) target = $region24
      $region23: #{tpu_custom_call.1} parent=15 // pred_region
        %s147 = sadd.s32 %s15, %s16
        %p148 = scmp.lt.s32.totalorder %s147, 0
        %s149 = scalar_select %p148, %s147, 0
        %s150 = smul.u32 2, %s149
        %p151 = scmp.lt.s32.totalorder %s150, 1
        %s152 = scalar_select %p151, %s150, 1
        %s153 = smul.addr %s152, 8
        %s154 = scalar_lea.vmem %s1, %s153
        %s155 = sadd.s32 %s15, %s16
        %p156 = scmp.lt.s32.totalorder %s155, 0
        %s157 = scalar_select %p156, %s155, 0
        %s158 = smul.u32 2, %s157
      $region24: #{tpu_custom_call.1} parent=15 // pred_fallthru
        _
    $region16: #{tpu_custom_call.1} parent=5 // pred_fallthru
      _
    %p159 = scmp.le.s32.totalorder 1, %s8
    %p160 = scmp.lt.s32.totalorder %s8, 3
    %p161 = pnand %p159, %p160
    %p162 = pneg %p161
    // Predicated region
    $region25: #{tpu_custom_call.1} parent=5 // pred_check
      _
    $region26: #{tpu_custom_call.1} parent=5 // pred_check_branch
      %164 = sbr.rel (%p161) target = $region28
    $region27: #{tpu_custom_call.1} parent=5 // pred_region
      %s165 = ssub.s32 %s8, 1
      %s166 = sadd.s32 %s17, %s18
      %p167 = scmp.lt.s32.totalorder %s166, 0
      %s168 = scalar_select %p167, %s166, 0
      %s169 = smul.u32 2, %s168
      %p170 = scmp.lt.s32.totalorder %s169, 1
      %s171 = scalar_select %p170, %s169, 1
      %s172 = smul.addr %s171, 8
      %s173 = scalar_lea.vmem %s0, %s172
      %p174 = pneg %p52
      %p175 = pneg %p49
      %s176 = sadd.s32 %s17, %s18
      %p177 = scmp.lt.s32.totalorder %s176, 0
      %s178 = scalar_select %p177, %s176, 0
      %s179 = smul.u32 2, %s178
      %p180 = scmp.lt.s32.totalorder %s179, 1
      %s181 = scalar_select %p180, %s179, 1
      %s182 = smul.addr %s181, 8
      %s183 = scalar_lea.vmem %s1, %s182
      %p184 = pneg %p84
      %p185 = pneg %p81
      %p186 = pneg %p110
      %p187 = pneg %p107
      %s188 = smul.u32 2, %s17
      %p189 = scmp.lt.s32.totalorder %s188, 3
      %s190 = scalar_select %p189, %s188, 3
      %s191 = smul.addr %s190, 8
      %s192 = scalar_lea.vmem %s2, %s191
      %s193 = sadd.s32 %s17, %s18
      %p194 = scmp.lt.s32.totalorder %s193, 0
      %s195 = scalar_select %p194, %s193, 0
      %s196 = smul.u32 2, %s195
      %p197 = scmp.lt.s32.totalorder %s196, 1
      %s198 = scalar_select %p197, %s196, 1
      %s199 = smul.addr %s198, 8
      %s200 = scalar_lea.vmem %s0, %s199
      %s201 = sadd.s32 %s17, %s18
      %p202 = scmp.lt.s32.totalorder %s201, 0
      %s203 = scalar_select %p202, %s201, 0
      %s204 = smul.u32 2, %s203
      %s205 = sadd.s32 %s17, %s18
      %p206 = scmp.lt.s32.totalorder %s205, 0
      %s207 = scalar_select %p206, %s205, 0
      %s208 = smul.u32 2, %s207
      %p209 = scmp.lt.s32.totalorder %s208, 1
      %s210 = scalar_select %p209, %s208, 1
      %s211 = smul.addr %s210, 8
      %s212 = scalar_lea.vmem %s1, %s211
      %s213 = sadd.s32 %s17, %s18
      %p214 = scmp.lt.s32.totalorder %s213, 0
      %s215 = scalar_select %p214, %s213, 0
      %s216 = smul.u32 2, %s215
      %s217 = smul.u32 2, %s17
      %p218 = scmp.lt.s32.totalorder %s217, 3
      %s219 = scalar_select %p218, %s217, 3
      %s220 = smul.addr %s219, 8
      %s221 = scalar_lea.vmem %s2, %s220
      %s222 = smul.u32 2, %s17
      %p223 = scmp.eq.s32.totalorder %s18, 0
      // Predicated region
      $region29: #{tpu_custom_call.1} parent=27 // pred_check
        %p224 = pneg %p223
      $region30: #{tpu_custom_call.1} parent=27 // pred_check_branch
        %226 = sbr.rel (%p224) target = $region32
      $region31: #{tpu_custom_call.1} parent=27 // pred_region
        %vm227 = vcmask 7168
        %228 = vst.msk [vmem:[%s221] sm:$0xff] %vm227, 0.0
        %229 = vst.msk [vmem:[%s221 + $0x8] sm:$0xff] %vm227, 0.0
        %v230 = vlaneseq
        %v231 = vand.u32 %v230, 127
        %vm232 = vcmask 122880
        %233 = vst.msk [vmem:[#allocation2] sm:$0x1] %vm232, %v231
      $region32: #{tpu_custom_call.1} parent=27 // pred_fallthru
        _
      %v234 = vld [vmem:[%s200] sm:$0xff]
      %v235 = vld [vmem:[%s200 + $0x8] sm:$0xff]
      %v236 = vld [vmem:[%s212] sm:$0xff]
      %v237 = vld [vmem:[%s212 + $0x8] sm:$0xff]
      %v238 = vld [vmem:[#allocation2] sm:$0x1]
      %v239 = vlaneseq
      %v240 = vshrl.u32 %v239, 7
      %v241 = vsub.s32 0, %v240
      %v242 = vrot.slane %v238, %v241
      %243 = vset.pattern.permute.xlu0 0
      %244 = vperm.xlu0 %243, %v236
      %v245 = vpop.permute.xlu0 %244
      %246 = vset.pattern.permute.xlu0 0
      %247 = vperm.xlu0 %246, %v237
      %v248 = vpop.permute.xlu0 %247
      %vm249 = vcmp.eq.s32.totalorder %v242, %v245
      %vm250 = vcmp.eq.s32.totalorder %v242, %v248
      %vm251 = vcmask 130048
      %v252 = vsel %vm251, %v234, -inf
      %253 = vmax.xlane.f32.xlu0 %v252
      %v254 = vpop.xlane.xlu0 %253
      %v255 = vsel %vm251, %v235, -inf
      %256 = vmax.xlane.f32.xlu0 %v255
      %v257 = vpop.xlane.xlu0 %256
      %v258 = vsub.f32 %v234, %v254
      %v259 = vsub.f32 %v235, %v257
      %v260 = vmul.f32 %v258, 1.442695
      %v261 = vpow.pop %v260
      %v262 = vmul.f32 %v259, 1.442695
      %v263 = vpow.pop %v262
      %v264 = vsel %vm251, %v261, 0.0
      %265 = vadd.xlane.f32.xlu0 %v264
      %v266 = vpop.xlane.xlu0 %265
      %v267 = vsel %vm251, %v263, 0.0
      %268 = vadd.xlane.f32.xlu0 %v267
      %v269 = vpop.xlane.xlu0 %268
      %v270 = vsel %vm249, %v258, 0.0
      %v271 = vsel %vm250, %v259, 0.0
      %v272 = vsel %vm251, %v270, 0.0
      %273 = vadd.xlane.f32.xlu0 %v272
      %v274 = vpop.xlane.xlu0 %273
      %v275 = vsel %vm251, %v271, 0.0
      %276 = vadd.xlane.f32.xlu0 %v275
      %v277 = vpop.xlane.xlu0 %276
      %v278 = vlog2.pop %v266
      %v279 = vmul.f32 %v278, 0.6931472
      %v280 = vlog2.pop %v269
      %v281 = vmul.f32 %v280, 0.6931472
      %v282 = vsub.f32 %v279, %v274
      %v283 = vsub.f32 %v281, %v277
      %s284 = sadd.s32 %s17, %s18
      %p285 = scmp.lt.s32.totalorder %s284, 1
      // Predicated region
      $region33: #{tpu_custom_call.1} parent=27 // pred_check
        %p286 = pneg %p285
      $region34: #{tpu_custom_call.1} parent=27 // pred_check_branch
        %288 = sbr.rel (%p286) target = $region36
      $region35: #{tpu_custom_call.1} parent=27 // pred_region
        %v289 = vld [vmem:[%s221] sm:$0xff]
        %v290 = vld [vmem:[%s221 + $0x8] sm:$0xff]
        %v291 = vadd.f32 %v289, %v282
        %v292 = vadd.f32 %v290, %v283
        %vm293 = vcmask 7168
        %294 = vst.msk [vmem:[%s221] sm:$0xff] %vm293, %v291
        %295 = vst.msk [vmem:[%s221 + $0x8] sm:$0xff] %vm293, %v292
      $region36: #{tpu_custom_call.1} parent=27 // pred_fallthru
        _
      %p296 = scmp.ge.s32.totalorder %s284, 1
      // Predicated region
      $region37: #{tpu_custom_call.1} parent=27 // pred_check
        %p297 = pneg %p296
      $region38: #{tpu_custom_call.1} parent=27 // pred_check_branch
        %299 = sbr.rel (%p297) target = $region40
      $region39: #{tpu_custom_call.1} parent=27 // pred_region
        %s300 = smul.u32 %s284, 16
        %v301 = vlaneseq
        %v302 = vshrl.u32 %v301, 7
        %v303 = vadd.s32 %v302, 8
        %v304 = vstv %s300
        %v305 = vadd.s32 %v304, %v302
        %v306 = vadd.s32 %v304, %v303
        %v307 = vld [vmem:[%s221] sm:$0xff]
        %v308 = vld [vmem:[%s221 + $0x8] sm:$0xff]
        %vm309 = vcmp.lt.s32.totalorder %v305, 16
        %vm310 = vcmp.lt.s32.totalorder %v306, 16
        %v311 = vsel %vm309, %v282, 0.0
        %v312 = vsel %vm310, %v283, 0.0
        %v313 = vadd.f32 %v307, %v311
        %v314 = vadd.f32 %v308, %v312
        %vm315 = vcmask 7168
        %316 = vst.msk [vmem:[%s221] sm:$0xff] %vm315, %v313
        %317 = vst.msk [vmem:[%s221 + $0x8] sm:$0xff] %vm315, %v314
      $region40: #{tpu_custom_call.1} parent=27 // pred_fallthru
        _
      %s318 = smul.u32 2, %s17
      %p319 = scmp.lt.s32.totalorder %s318, 3
      %s320 = scalar_select %p319, %s318, 3
      %s321 = smul.addr %s320, 8
      %s322 = scalar_lea.vmem %s2, %s321
      // Predicated region
      $region41: #{tpu_custom_call.1} parent=27 // pred_check
        %p323 = pneg %p107
      $region42: #{tpu_custom_call.1} parent=27 // pred_check_branch
        %325 = sbr.rel (%p323) target = $region44
      $region43: #{tpu_custom_call.1} parent=27 // pred_region
        %s326 = smul.u32 2, %s17
      $region44: #{tpu_custom_call.1} parent=27 // pred_fallthru
        _
    $region28: #{tpu_custom_call.1} parent=5 // pred_fallthru
      _
    %p327 = scmp.le.s32.totalorder 2, %s8
    // Predicated region
    $region45: #{tpu_custom_call.1} parent=5 // pred_check
      %p328 = pneg %p327
    $region46: #{tpu_custom_call.1} parent=5 // pred_check_branch
      %330 = sbr.rel (%p328) target = $region48
    $region47: #{tpu_custom_call.1} parent=5 // pred_region
      %s331 = ssub.s32 %s8, 2
      // Predicated region
      $region49: #{tpu_custom_call.1} parent=47 // pred_check
        %p332 = pneg %p113
      $region50: #{tpu_custom_call.1} parent=47 // pred_check_branch
        %334 = sbr.rel (%p332) target = $region52
      $region51: #{tpu_custom_call.1} parent=47 // pred_region
        %s335 = smul.u32 2, %s19
        %p336 = scmp.lt.s32.totalorder %s335, 3
        %s337 = scalar_select %p336, %s335, 3
        %s338 = smul.addr %s337, 8
        %s339 = scalar_lea.vmem %s2, %s338
      $region52: #{tpu_custom_call.1} parent=47 // pred_fallthru
        _
    $region48: #{tpu_custom_call.1} parent=5 // pred_fallthru
      _
  $region6: #{tpu_custom_call.1} parent=0 // loop_footer
    %s12 = sadd.s32 1, %s8
  $region7: #{tpu_custom_call.1} parent=0 // loop_footer_branch
    %7 = sbr.rel target = $region3
  $region8: #{tpu_custom_call.1} parent=0 // loop_exit
    _

</llo_original>
